<compile_context>
chip_gen: v6e
topology: v6e:2x2x1
jax: 0.10.0
libtpu: 0.0.40
codegen_flags: <defaults>
</compile_context>

<pallas_src>
import numpy as np
import jax
import jax.numpy as jnp
from jax.experimental import pallas as pl
from jax.experimental.pallas import tpu as pltpu

_LANE_MAX = 512                     # widest lane-dense last dim we use
_TARGET_TILE_BYTES = 4 * 1024 * 1024   # ~4 MiB tile -> 16 MiB double-buffered
_VMEM_LIMIT_BYTES = 32 * 1024 * 1024   # legal on v5e/v6e/v7x, leaves headroom
_MIN_PALLAS_ELEMS = 64 * 1024       # below this, plain XLA wins


def _round_up(a: int, b: int) -> int:
    return ((a + b - 1) // b) * b


def _scale_mul_kernel(scale_ref, x_ref, o_ref):
    # scale_ref: (1,) f32 in SMEM holding exp(log_scale) (exp hoisted to the
    # wrapper). Multiply in f32 (promotion), cast on store.
    o_ref[...] = (x_ref[...] * scale_ref[0]).astype(o_ref.dtype)


def _choose_blocking(rows: int, lane: int, itemsize: int, sub: int):
    """Pick a sublane-aligned row-tile and 1-D grid length.

    Keeps >=2 (even) blocks when there is enough work so both v7x TCs get
    fed, and sizes blocks as evenly as possible so only the very last block
    (if any) is ragged.
    """
    bytes_per_row = lane * itemsize
    total_bytes = rows * bytes_per_row

    target_rows = max(sub, ((_TARGET_TILE_BYTES // bytes_per_row) // sub) * sub)
    nblocks = pl.cdiv(rows, target_rows)

    # v7x megacore: never strand a TensorCore once the tensor is non-trivial,
    # and keep the block count even for 1:1 load balance.
    if total_bytes > 512 * 1024:
        nblocks = max(nblocks, 2)
        if nblocks % 2:
            nblocks += 1

    if nblocks <= 1:
        return rows, 1              # single full-extent block (always legal)

    block_r = _round_up(pl.cdiv(rows, nblocks), sub)
    grid_n = pl.cdiv(rows, block_r)
    return block_r, grid_n


def _scale_flat_pallas(xf: jax.Array, scale_f32: jax.Array) -> jax.Array:
    """Pallas path for a flat float array whose length is a multiple of 128."""
    n = xf.shape[0]
    dtype = xf.dtype
    itemsize = jnp.dtype(dtype).itemsize
    sub = max(8, 32 // itemsize)    # sublane packing: 8 f32 / 16 bf16

    if n % _LANE_MAX == 0:
        lane = _LANE_MAX
    elif n % 256 == 0:
        lane = 256
    else:
        lane = 128
    rows = n // lane

    block_r, grid_n = _choose_blocking(rows, lane, itemsize, sub)

    x2d = xf.reshape(rows, lane)                # free metadata reshape
    scale_smem = scale_f32.reshape(1)

    cost = pl.CostEstimate(
        flops=n,
        transcendentals=0,
        bytes_accessed=2 * n * itemsize + 4,
    )

    out2d = pl.pallas_call(
        _scale_mul_kernel,
        out_shape=jax.ShapeDtypeStruct((rows, lane), dtype),
        grid=(grid_n,),
        in_specs=[
            pl.BlockSpec(memory_space=pltpu.MemorySpace.SMEM),  # scalar param
            pl.BlockSpec((block_r, lane), lambda i: (i, 0)),    # row tile
        ],
        out_specs=pl.BlockSpec((block_r, lane), lambda i: (i, 0)),
        compiler_params=pltpu.CompilerParams(
            dimension_semantics=("parallel",),   # rows independent -> 2 TCs
            vmem_limit_bytes=_VMEM_LIMIT_BYTES,
        ),
        cost_estimate=cost,
    )(scale_smem, x2d)

    return out2d.reshape(n)


def logit_scale(x: jax.Array, log_scale: jax.Array,
                *, min_pallas_elems: int = _MIN_PALLAS_ELEMS) -> jax.Array:
    """y = x * exp(log_scale), elementwise. `log_scale` is a 0-d/1-elem array."""
    if not jnp.issubdtype(x.dtype, jnp.floating):
        raise TypeError("logit_scale is float-only (matches PyTorch LogitScale).")

    scale_f32 = jnp.exp(jnp.asarray(log_scale, jnp.float32).reshape(()))
    n = x.size
    if n == 0:
        return x

    # Small-tensor fallback: XLA fuses the scalar multiply into neighbors for
    # free; kernel launch / pipeline warm-up would dominate here.
    if n < min_pallas_elems:
        return (x.astype(jnp.float32) * scale_f32).astype(x.dtype)

    orig_shape = x.shape
    dtype = x.dtype
    xf = x.reshape(-1)                          # free metadata reshape

    if n % 128 == 0:
        # Lane-aligned fast path: zero extra HBM passes (no pad, no slice).
        return _scale_flat_pallas(xf, scale_f32).reshape(orig_shape)

    # Large & lane-misaligned: Pallas on the 512-aligned prefix, tiny XLA op
    # on the <=511-element tail, one concatenate to stitch.  Cheaper than the
    # old whole-array pad + output-slice passes.
    n_main = (n // _LANE_MAX) * _LANE_MAX
    y_main = _scale_flat_pallas(xf[:n_main], scale_f32)
    y_tail = (xf[n_main:].astype(jnp.float32) * scale_f32).astype(dtype)
    return jnp.concatenate([y_main, y_tail]).reshape(orig_shape)


if __name__ == "__main__":
    # nn.Parameter(torch.ones([]) * np.log(scale)); the PyTorch default
    # scale=0 gives log(0) = -inf (all-zero outputs), so use a meaningful
    # CLIP-style init instead.
    scale_init = 1.0 / 0.07
    log_scale = jnp.array(np.log(scale_init), dtype=jnp.float32)
    exp_s = np.exp(np.log(scale_init)).astype(np.float32)

    # 1) Module-shaped small input (2,4,16,16) -> small-tensor XLA fallback.
    x = jax.random.normal(jax.random.PRNGKey(0), (2, 4, 16, 16), dtype=jnp.float32)
    y = jax.block_until_ready(logit_scale(x, log_scale))
    np.testing.assert_allclose(np.asarray(y), np.asarray(x) * exp_s,
                               rtol=1e-6, atol=1e-6)

    # 2) Force the Pallas kernel on a small aligned slab (single-block grid).
    x2 = jax.random.normal(jax.random.PRNGKey(1), (64, 512), dtype=jnp.float32)
    y2 = jax.block_until_ready(logit_scale(x2, log_scale, min_pallas_elems=0))
    np.testing.assert_allclose(np.asarray(y2), np.asarray(x2) * exp_s,
                               rtol=1e-6, atol=1e-6)

    # 3) Larger aligned input -> multi-block "parallel" grid path.
    x3 = jax.random.normal(jax.random.PRNGKey(2), (512, 2048), dtype=jnp.float32)
    y3 = jax.block_until_ready(logit_scale(x3, log_scale))
    np.testing.assert_allclose(np.asarray(y3), np.asarray(x3) * exp_s,
                               rtol=1e-6, atol=1e-6)

    # 4) bf16 input -> f32 math + explicit-cast store path.
    x4 = jax.random.normal(jax.random.PRNGKey(3), (256, 1024), dtype=jnp.bfloat16)
    y4 = jax.block_until_ready(logit_scale(x4, log_scale))
    y4_ref = (np.asarray(x4, dtype=np.float32) * exp_s)
    np.testing.assert_allclose(np.asarray(y4, dtype=np.float32), y4_ref,
                               rtol=2e-2, atol=2e-2)

    # 5) Large, lane-misaligned input -> aligned-prefix kernel + XLA tail.
    x5 = jax.random.normal(jax.random.PRNGKey(4), (301, 257), dtype=jnp.float32)
    y5 = jax.block_until_ready(logit_scale(x5, log_scale))
    np.testing.assert_allclose(np.asarray(y5), np.asarray(x5) * exp_s,
                               rtol=1e-6, atol=1e-6)

    # 6) Small, misaligned shape -> fallback path.
    x6 = jax.random.normal(jax.random.PRNGKey(5), (3, 5, 7), dtype=jnp.float32)
    y6 = jax.block_until_ready(logit_scale(x6, log_scale))
    np.testing.assert_allclose(np.asarray(y6), np.asarray(x6) * exp_s,
                               rtol=1e-6, atol=1e-6)

    print("KERNEL_OK")
</pallas_src>

<mosaic_0001>
module attributes {stable_mosaic.version = 11 : i64} {
  func.func @_scale_mul_kernel(%arg0: i32, %arg1: memref<1xf32, #tpu.memory_space<smem>>, %arg2: memref<64x512xf32, #tpu.memory_space<vmem>>, %arg3: memref<64x512xf32, #tpu.memory_space<vmem>>) attributes {dimension_semantics = [#tpu.dimension_semantics<parallel>], iteration_bounds = array<i64: 1>, scalar_prefetch = 0 : i64, scratch_operands = 0 : i64, tpu.core_type = #tpu.core_type<tc>, window_params = [{transform_indices = @transform_0, window_bounds = array<i64: 1>}, {transform_indices = @transform_1, window_bounds = array<i64: 64, 512>}, {transform_indices = @transform_2, window_bounds = array<i64: 64, 512>}]} {
    %c0 = arith.constant 0 : index
    %c0_0 = arith.constant 0 : index
    %0 = vector.load %arg2[%c0, %c0_0] : memref<64x512xf32, #tpu.memory_space<vmem>>, vector<64x512xf32>
    %c0_1 = arith.constant 0 : index
    %1 = memref.load %arg1[%c0_1] : memref<1xf32, #tpu.memory_space<smem>>
    %2 = vector.broadcast %1 : f32 to vector<64x512xf32>
    %3 = arith.mulf %0, %2 : vector<64x512xf32>
    %c0_2 = arith.constant 0 : index
    %c0_3 = arith.constant 0 : index
    %4 = vector.load %arg3[%c0_2, %c0_3] : memref<64x512xf32, #tpu.memory_space<vmem>>, vector<64x512xf32>
    tpu.vector_store %arg3[%c0_2, %c0_3], %3 {strides = array<i32>} : memref<64x512xf32, #tpu.memory_space<vmem>>, vector<64x512xf32>,
    return
  }
  func.func @transform_0(%arg0: i32) -> i32 {
    %c0_i32 = arith.constant 0 : i32
    %c0_i32_0 = arith.constant 0 : i32
    return %c0_i32 : i32
  }
  func.func @transform_1(%arg0: i32) -> (i32, i32) {
    %c0_i32 = arith.constant 0 : i32
    %c0_i32_0 = arith.constant 0 : i32
    return %arg0, %c0_i32 : i32, i32
  }
  func.func @transform_2(%arg0: i32) -> (i32, i32) {
    %c0_i32 = arith.constant 0 : i32
    %c0_i32_0 = arith.constant 0 : i32
    return %arg0, %c0_i32 : i32, i32
  }
}

</mosaic_0001>

<llo_original>
// kernel: tpu_custom_call.1
$region0: #{tpu_custom_call.1}
  #allocation0 [shape = 'u32[]', space=smem, size = 0x4, offset = 0x4, fixed_abs, tag = 'smem constant byte address 0x4 - core index']
  #allocation1 [shape = 'u32[144,128]{1,0:T(1,128)}', space=vmem, size = 0x12000, scoped, tag = 'internal scratch']
  #allocation2 [shape = 'f32[1]{0:T(128)S(6)}', space=smem, size = 0x200, scoped, tag = 'scoped memory for tpu_custom_call.1']
  %s0 = inlined_call_operand.<no memory space> [shape: f32[1], index: 0, kind: input, shape index: {}]
  %s1 = inlined_call_operand.hbm [shape: f32[64,512], index: 1, kind: input, shape index: {}]
  %s2 = inlined_call_operand.hbm [shape: f32[64,512], index: 2, kind: output, shape index: {}]
  %s3 = sld [smem:[#allocation0]]
  $region22: #{tpu_custom_call.1} parent=0
    _
  %s5 = ssub.s32 1, %s3
  %s6 = scalar_select 0, %s5, %s3
  %7 = sst [smem:[#allocation2]] %s0
  $region1: #{tpu_custom_call.1} parent=0
    #allocation3 [shape = 'u8[131072]{0}', space=vmem, size = 0x20000, scoped, tag = 'input window, operand 1, single buffered']
    #allocation4 [shape = 's32[1]{0}', space=sflag, size = 0x4, scoped, tag = 'scoped memory for tpu_custom_call.1']
    #allocation5 [shape = 's32[1]{0}', space=sflag, size = 0x4, scoped, tag = 'scoped memory for tpu_custom_call.1']
    #allocation6 [shape = 'u8[131072]{0}', space=vmem, size = 0x20000, scoped, tag = 'output window, operand 0, single buffered']
    %8 = vsyncpa [#allocation4], 0
    %9 = vsyncpa [#allocation5], 0
    // Predicated region
    $region2: #{tpu_custom_call.1} parent=1 // pred_check
      _
    $region3: #{tpu_custom_call.1} parent=1 // pred_check_branch
      %11 = sbr.rel (0) target = $region5
    $region4: #{tpu_custom_call.1} parent=1 // pred_region
      _
    $region5: #{tpu_custom_call.1} parent=1 // pred_fallthru
      _
    // Predicated region
    $region6: #{tpu_custom_call.1} parent=1 // pred_check
      _
    $region7: #{tpu_custom_call.1} parent=1 // pred_check_branch
      %13 = sbr.rel (0) target = $region9
    $region8: #{tpu_custom_call.1} parent=1 // pred_region
      %s15 = ssub.s32 4096, 4096
      %16 = vsyncadd [#allocation4], %s15
      %s17 = sshll.u32 [#allocation3], 4
      %s18 = int_to_ptr.vmem [resolvable:$true] %s17
      %23 = dma.hbm_to_vmem [thread:$0]  %s1, 4096, %s18, [#allocation4], 512, 512, 32
    $region9: #{tpu_custom_call.1} parent=1 // pred_fallthru
      _
    // Predicated region
    $region10: #{tpu_custom_call.1} parent=1 // pred_check
      _
    $region11: #{tpu_custom_call.1} parent=1 // pred_check_branch
      %25 = sbr.rel (0) target = $region13
    $region12: #{tpu_custom_call.1} parent=1 // pred_region
      %26 = dma.done [#allocation4], 4096
    $region13: #{tpu_custom_call.1} parent=1 // pred_fallthru
      _
    %v27 = vld [vmem:[#allocation3] sm:$0xff]
    %v28 = vld [vmem:[#allocation3 + $0x8] sm:$0xff]
    %v29 = vld [vmem:[#allocation3 + $0x10] sm:$0xff]
    %v30 = vld [vmem:[#allocation3 + $0x18] sm:$0xff]
    %v31 = vld [vmem:[#allocation3 + $0x20] sm:$0xff]
    %v32 = vld [vmem:[#allocation3 + $0x28] sm:$0xff]
    %v33 = vld [vmem:[#allocation3 + $0x30] sm:$0xff]
    %v34 = vld [vmem:[#allocation3 + $0x38] sm:$0xff]
    %v35 = vld [vmem:[#allocation3 + $0x40] sm:$0xff]
    %v36 = vld [vmem:[#allocation3 + $0x48] sm:$0xff]
    %v37 = vld [vmem:[#allocation3 + $0x50] sm:$0xff]
    %v38 = vld [vmem:[#allocation3 + $0x58] sm:$0xff]
    %v39 = vld [vmem:[#allocation3 + $0x60] sm:$0xff]
    %v40 = vld [vmem:[#allocation3 + $0x68] sm:$0xff]
    %v41 = vld [vmem:[#allocation3 + $0x70] sm:$0xff]
    %v42 = vld [vmem:[#allocation3 + $0x78] sm:$0xff]
    %v43 = vld [vmem:[#allocation3 + $0x80] sm:$0xff]
    %v44 = vld [vmem:[#allocation3 + $0x88] sm:$0xff]
    %v45 = vld [vmem:[#allocation3 + $0x90] sm:$0xff]
    %v46 = vld [vmem:[#allocation3 + $0x98] sm:$0xff]
    %v47 = vld [vmem:[#allocation3 + $0xa0] sm:$0xff]
    %v48 = vld [vmem:[#allocation3 + $0xa8] sm:$0xff]
    %v49 = vld [vmem:[#allocation3 + $0xb0] sm:$0xff]
    %v50 = vld [vmem:[#allocation3 + $0xb8] sm:$0xff]
    %v51 = vld [vmem:[#allocation3 + $0xc0] sm:$0xff]
    %v52 = vld [vmem:[#allocation3 + $0xc8] sm:$0xff]
    %v53 = vld [vmem:[#allocation3 + $0xd0] sm:$0xff]
    %v54 = vld [vmem:[#allocation3 + $0xd8] sm:$0xff]
    %v55 = vld [vmem:[#allocation3 + $0xe0] sm:$0xff]
    %v56 = vld [vmem:[#allocation3 + $0xe8] sm:$0xff]
    %v57 = vld [vmem:[#allocation3 + $0xf0] sm:$0xff]
    %v58 = vld [vmem:[#allocation3 + $0xf8] sm:$0xff]
    %s59 = sld [smem:[#allocation2]]
    %v60 = vstv %s59
    %v61 = vmul.f32 %v27, %v60
    %v62 = vmul.f32 %v28, %v60
    %v63 = vmul.f32 %v29, %v60
    %v64 = vmul.f32 %v30, %v60
    %v65 = vmul.f32 %v31, %v60
    %v66 = vmul.f32 %v32, %v60
    %v67 = vmul.f32 %v33, %v60
    %v68 = vmul.f32 %v34, %v60
    %v69 = vmul.f32 %v35, %v60
    %v70 = vmul.f32 %v36, %v60
    %v71 = vmul.f32 %v37, %v60
    %v72 = vmul.f32 %v38, %v60
    %v73 = vmul.f32 %v39, %v60
    %v74 = vmul.f32 %v40, %v60
    %v75 = vmul.f32 %v41, %v60
    %v76 = vmul.f32 %v42, %v60
    %v77 = vmul.f32 %v43, %v60
    %v78 = vmul.f32 %v44, %v60
    %v79 = vmul.f32 %v45, %v60
    %v80 = vmul.f32 %v46, %v60
    %v81 = vmul.f32 %v47, %v60
    %v82 = vmul.f32 %v48, %v60
    %v83 = vmul.f32 %v49, %v60
    %v84 = vmul.f32 %v50, %v60
    %v85 = vmul.f32 %v51, %v60
    %v86 = vmul.f32 %v52, %v60
    %v87 = vmul.f32 %v53, %v60
    %v88 = vmul.f32 %v54, %v60
    %v89 = vmul.f32 %v55, %v60
    %v90 = vmul.f32 %v56, %v60
    %v91 = vmul.f32 %v57, %v60
    %v92 = vmul.f32 %v58, %v60
    %93 = vst [vmem:[#allocation6] sm:$0xff] %v61
    %94 = vst [vmem:[#allocation6 + $0x8] sm:$0xff] %v62
    %95 = vst [vmem:[#allocation6 + $0x10] sm:$0xff] %v63
    %96 = vst [vmem:[#allocation6 + $0x18] sm:$0xff] %v64
    %97 = vst [vmem:[#allocation6 + $0x20] sm:$0xff] %v65
    %98 = vst [vmem:[#allocation6 + $0x28] sm:$0xff] %v66
    %99 = vst [vmem:[#allocation6 + $0x30] sm:$0xff] %v67
    %100 = vst [vmem:[#allocation6 + $0x38] sm:$0xff] %v68
    %101 = vst [vmem:[#allocation6 + $0x40] sm:$0xff] %v69
    %102 = vst [vmem:[#allocation6 + $0x48] sm:$0xff] %v70
    %103 = vst [vmem:[#allocation6 + $0x50] sm:$0xff] %v71
    %104 = vst [vmem:[#allocation6 + $0x58] sm:$0xff] %v72
    %105 = vst [vmem:[#allocation6 + $0x60] sm:$0xff] %v73
    %106 = vst [vmem:[#allocation6 + $0x68] sm:$0xff] %v74
    %107 = vst [vmem:[#allocation6 + $0x70] sm:$0xff] %v75
    %108 = vst [vmem:[#allocation6 + $0x78] sm:$0xff] %v76
    %109 = vst [vmem:[#allocation6 + $0x80] sm:$0xff] %v77
    %110 = vst [vmem:[#allocation6 + $0x88] sm:$0xff] %v78
    %111 = vst [vmem:[#allocation6 + $0x90] sm:$0xff] %v79
    %112 = vst [vmem:[#allocation6 + $0x98] sm:$0xff] %v80
    %113 = vst [vmem:[#allocation6 + $0xa0] sm:$0xff] %v81
    %114 = vst [vmem:[#allocation6 + $0xa8] sm:$0xff] %v82
    %115 = vst [vmem:[#allocation6 + $0xb0] sm:$0xff] %v83
    %116 = vst [vmem:[#allocation6 + $0xb8] sm:$0xff] %v84
    %117 = vst [vmem:[#allocation6 + $0xc0] sm:$0xff] %v85
    %118 = vst [vmem:[#allocation6 + $0xc8] sm:$0xff] %v86
    %119 = vst [vmem:[#allocation6 + $0xd0] sm:$0xff] %v87
    %120 = vst [vmem:[#allocation6 + $0xd8] sm:$0xff] %v88
    %121 = vst [vmem:[#allocation6 + $0xe0] sm:$0xff] %v89
    %122 = vst [vmem:[#allocation6 + $0xe8] sm:$0xff] %v90
    %123 = vst [vmem:[#allocation6 + $0xf0] sm:$0xff] %v91
    %124 = vst [vmem:[#allocation6 + $0xf8] sm:$0xff] %v92
    // Predicated region
    $region14: #{tpu_custom_call.1} parent=1 // pred_check
      _
    $region15: #{tpu_custom_call.1} parent=1 // pred_check_branch
      %126 = sbr.rel (0) target = $region17
    $region16: #{tpu_custom_call.1} parent=1 // pred_region
      %s128 = ssub.s32 4096, 4096
      %129 = vsyncadd [#allocation5], %s128
      %s130 = sshll.u32 [#allocation6], 4
      %s131 = int_to_ptr.vmem [resolvable:$true] %s130
      %136 = dma.vmem_to_hbm [thread:$0]  %s131, 4096, %s2, [#allocation5], 512, 512, 32
    $region17: #{tpu_custom_call.1} parent=1 // pred_fallthru
      _
    // Predicated region
    $region18: #{tpu_custom_call.1} parent=1 // pred_check
      _
    $region19: #{tpu_custom_call.1} parent=1 // pred_check_branch
      %138 = sbr.rel (0) target = $region21
    $region20: #{tpu_custom_call.1} parent=1 // pred_region
      %139 = dma.done [#allocation5], 4096
    $region21: #{tpu_custom_call.1} parent=1 // pred_fallthru
      _
    %140 = vsyncpa [#allocation4], 1
    %141 = vsyncpa [#allocation5], 1

</llo_original>
